<compile_context>
chip_gen: v6e
topology: v6e:2x2x1
jax: 0.10.0
libtpu: 0.0.40
codegen_flags: <defaults>
</compile_context>

<pallas_src>
import functools

import jax
import jax.numpy as jnp
from jax import lax
from jax.experimental import pallas as pl
from jax.experimental.pallas import tpu as pltpu

# Quantization parameters baked into the PyTorch module
# (quantized_decomposed.dequantize_per_tensor: (q - zero_point) * scale).
X_SCALE, X_ZERO_POINT = 0.0215, -25
Y_SCALE, Y_ZERO_POINT = 0.0176, 18

_LANES = 128               # TPU lane width
_SLAB_ROWS = 512           # inner-loop slab: 512 x 128 elements per step
_MAX_TILE_ROWS = 32768     # 32768 x 128 int8 = 4 MiB per input block
_SINGLE_BLOCK_ROWS = 2048  # <= 256 KiB / input -> just one grid step


def _round_up(a: int, b: int) -> int:
    return (a + b - 1) // b * b


def _accumulate(x_ref, y_ref, rows: int, acc):
    """Add sum over the first `rows` rows of (x - zx)*(y - zy) into the (8,128)
    f32 accumulator `acc`.  `rows` is a static Python int, so the ragged tail is
    handled with static slice sizes (no dynamic masking ops on the hot path)."""
    full = rows // _SLAB_ROWS   # static
    rem = rows % _SLAB_ROWS     # static

    def slab(s, a):
        start = pl.multiple_of(s * _SLAB_ROWS, _SLAB_ROWS)
        xi = x_ref[pl.ds(start, _SLAB_ROWS), :].astype(jnp.float32) - X_ZERO_POINT
        yi = y_ref[pl.ds(start, _SLAB_ROWS), :].astype(jnp.float32) - Y_ZERO_POINT
        prod = xi * yi
        # (512,128) -> (64,8,128) is tile-aligned (free); axis-0 sum is plain
        # vreg adds into the 8x128 carry (no XLU reduce per slab).
        return a + jnp.sum(prod.reshape(_SLAB_ROWS // 8, 8, _LANES), axis=0)

    if full > 0:
        acc = lax.fori_loop(0, full, slab, acc, unroll=2)
    if rem > 0:
        start = full * _SLAB_ROWS                     # static
        xi = x_ref[pl.ds(start, rem), :].astype(jnp.float32) - X_ZERO_POINT
        yi = y_ref[pl.ds(start, rem), :].astype(jnp.float32) - Y_ZERO_POINT
        col = jnp.sum(xi * yi, axis=0, keepdims=True)  # (1, 128)
        row0 = lax.broadcasted_iota(jnp.int32, (8, _LANES), 0) == 0
        acc = acc + jnp.where(row0, jnp.broadcast_to(col, (8, _LANES)), 0.0)
    return acc


def _qdot_kernel(x_ref, y_ref, o_ref, acc_ref, *, inner, blocks, tile_rows,
                 full_blocks, last_valid):
    c = pl.program_id(0)          # core-split ("parallel") axis
    i = pl.program_id(1)          # reduction ("arbitrary") axis
    blk = c * inner + i           # logical row-block handled at this step

    @pl.when(i == 0)
    def _init():
        acc_ref[...] = jnp.zeros_like(acc_ref)

    @pl.when(blk < full_blocks)
    def _full_block():
        acc_ref[...] = _accumulate(x_ref, y_ref, tile_rows, acc_ref[...])

    if last_valid < tile_rows:    # statically-known ragged final block
        @pl.when(blk == blocks - 1)
        def _ragged_block():
            acc_ref[...] = _accumulate(x_ref, y_ref, last_valid, acc_ref[...])
    # Steps with blk >= blocks (odd block count on the 2-core split) do nothing;
    # their (clamped) input DMA is simply ignored.

    @pl.when(i == inner - 1)
    def _finalize():
        col = jnp.sum(acc_ref[...], axis=0, keepdims=True)    # (1, 128)
        total = jnp.sum(col, axis=1, keepdims=True)           # (1, 1)
        total = total * (X_SCALE * Y_SCALE)                   # scales applied once
        o_ref[...] = jnp.broadcast_to(total, o_ref.shape)     # lane-dense store


def matmul_qint8_vv(x: jax.Array, y: jax.Array) -> jax.Array:
    """Equivalent of AtenMatmulQint8VV.forward for 1-D int8 inputs."""
    assert x.ndim == 1 and y.ndim == 1 and x.shape == y.shape
    assert x.dtype == jnp.int8 and y.dtype == jnp.int8
    n = x.shape[0]

    # Pad only to a 128-lane multiple (needed for the 2-D view); pad values are
    # each tensor's zero point so they dequantize to exactly 0.
    padded = _round_up(max(n, 1), _LANES)
    if padded != n:
        x = jnp.pad(x, (0, padded - n), constant_values=X_ZERO_POINT)
        y = jnp.pad(y, (0, padded - n), constant_values=Y_ZERO_POINT)
    rows = padded // _LANES
    x2 = x.reshape(rows, _LANES)   # contiguous row-major reshape: free
    y2 = y.reshape(rows, _LANES)

    if rows <= _SINGLE_BLOCK_ROWS:
        tile_rows, blocks = rows, 1          # block == full array dim (always legal)
    else:
        tile_rows = min(_MAX_TILE_ROWS, max(1024, _round_up(pl.cdiv(rows, 8), 32)))
        blocks = pl.cdiv(rows, tile_rows)

    ncores = 2 if blocks >= 2 else 1         # v7x: split reduction across both TCs
    inner = pl.cdiv(blocks, ncores)
    last_valid = rows - (blocks - 1) * tile_rows
    full_blocks = blocks if last_valid == tile_rows else blocks - 1

    def in_map(c, i):
        # Clamp so the padding step of an odd block count re-reads the last real
        # block instead of DMA'ing out of bounds (that step's data is unused).
        return (jnp.minimum(c * inner + i, blocks - 1), 0)

    kernel = functools.partial(
        _qdot_kernel, inner=inner, blocks=blocks, tile_rows=tile_rows,
        full_blocks=full_blocks, last_valid=last_valid)

    out = pl.pallas_call(
        kernel,
        out_shape=jax.ShapeDtypeStruct((8 * ncores, _LANES), jnp.float32),
        grid=(ncores, inner),
        in_specs=[
            pl.BlockSpec((tile_rows, _LANES), in_map),
            pl.BlockSpec((tile_rows, _LANES), in_map),
        ],
        out_specs=pl.BlockSpec((8, _LANES), lambda c, i: (c, 0)),
        scratch_shapes=[pltpu.VMEM((8, _LANES), jnp.float32)],
        compiler_params=pltpu.CompilerParams(
            dimension_semantics=("parallel", "arbitrary"),
            vmem_limit_bytes=32 * 1024 * 1024,   # safe hard budget on v5e/v6e/v7x
        ),
    )(x2, y2)

    # Each core's partial result is broadcast over its (8, 128) output block;
    # pick one element per core and sum.  torch.matmul(1-D, 1-D) -> 0-d scalar.
    return jnp.sum(out[::8, 0])


if __name__ == "__main__":
    key = jax.random.PRNGKey(0)
    k1, k2 = jax.random.split(key)
    n = 1024  # small 1-D int8 vectors, consistent with ([-1], torch.int8)
    x = jax.random.randint(k1, (n,), -128, 128, dtype=jnp.int32).astype(jnp.int8)
    y = jax.random.randint(k2, (n,), -128, 128, dtype=jnp.int32).astype(jnp.int8)

    z = jax.block_until_ready(matmul_qint8_vv(x, y))

    # Plain-JAX reference (dequantize -> dot).
    x_deq = (x.astype(jnp.float32) - X_ZERO_POINT) * X_SCALE
    y_deq = (y.astype(jnp.float32) - Y_ZERO_POINT) * Y_SCALE
    ref = jnp.dot(x_deq, y_deq)

    assert z.shape == ()
    assert z.dtype == jnp.float32
    assert jnp.allclose(z, ref, rtol=1e-5, atol=1e-2), (z, ref)

    print("KERNEL_OK")
</pallas_src>

<mosaic_0001>
module attributes {stable_mosaic.version = 11 : i64} {
  func.func @_qdot_kernel(%arg0: i32, %arg1: i32, %arg2: memref<8x128xi8, #tpu.memory_space<vmem>>, %arg3: memref<8x128xi8, #tpu.memory_space<vmem>>, %arg4: memref<8x128xf32, #tpu.memory_space<vmem>>, %arg5: memref<8x128xf32, #tpu.memory_space<vmem>>) attributes {dimension_semantics = [#tpu.dimension_semantics<parallel>, #tpu.dimension_semantics<arbitrary>], iteration_bounds = array<i64: 1, 1>, scalar_prefetch = 0 : i64, scratch_operands = 1 : i64, tpu.core_type = #tpu.core_type<tc>, window_params = [{transform_indices = @transform_0, window_bounds = array<i64: 8, 128>}, {transform_indices = @transform_1, window_bounds = array<i64: 8, 128>}, {transform_indices = @transform_2, window_bounds = array<i64: 8, 128>}]} {
    %c1_i32 = arith.constant 1 : i32
    %0 = arith.muli %arg0, %c1_i32 : i32
    %1 = arith.addi %0, %arg1 : i32
    %c0_i32 = arith.constant 0 : i32
    %2 = arith.cmpi eq, %arg1, %c0_i32 : i32
    %3 = arith.extui %2 : i1 to i32
    %c0_i32_0 = arith.constant 0 : i32
    %4 = arith.cmpi ne, %3, %c0_i32_0 : i32
    scf.if %4 {
      %cst = arith.constant 0.000000e+00 : f32
      %11 = vector.broadcast %cst : f32 to vector<8x128xf32>
      %c0 = arith.constant 0 : index
      %c0_5 = arith.constant 0 : index
      %12 = vector.load %arg5[%c0, %c0_5] : memref<8x128xf32, #tpu.memory_space<vmem>>, vector<8x128xf32>
      tpu.vector_store %arg5[%c0, %c0_5], %11 {strides = array<i32>} : memref<8x128xf32, #tpu.memory_space<vmem>>, vector<8x128xf32>,
    } else {
    }
    %c1_i32_1 = arith.constant 1 : i32
    %5 = arith.cmpi slt, %1, %c1_i32_1 : i32
    %6 = arith.extui %5 : i1 to i32
    %c0_i32_2 = arith.constant 0 : i32
    %7 = arith.cmpi ne, %6, %c0_i32_2 : i32
    scf.if %7 {
      %c0 = arith.constant 0 : index
      %c0_5 = arith.constant 0 : index
      %11 = vector.load %arg5[%c0, %c0_5] : memref<8x128xf32, #tpu.memory_space<vmem>>, vector<8x128xf32>
      %c0_6 = arith.constant 0 : index
      %c0_7 = arith.constant 0 : index
      %12 = vector.load %arg2[%c0_6, %c0_7] : memref<8x128xi8, #tpu.memory_space<vmem>>, vector<8x128xi8>
      %13 = arith.sitofp %12 : vector<8x128xi8> to vector<8x128xf32>
      %cst = arith.constant -2.500000e+01 : f32
      %14 = vector.broadcast %cst : f32 to vector<8x128xf32>
      %15 = arith.subf %13, %14 : vector<8x128xf32>
      %c0_8 = arith.constant 0 : index
      %c0_9 = arith.constant 0 : index
      %16 = vector.load %arg3[%c0_8, %c0_9] : memref<8x128xi8, #tpu.memory_space<vmem>>, vector<8x128xi8>
      %17 = arith.sitofp %16 : vector<8x128xi8> to vector<8x128xf32>
      %cst_10 = arith.constant 1.800000e+01 : f32
      %18 = vector.broadcast %cst_10 : f32 to vector<8x128xf32>
      %19 = arith.subf %17, %18 : vector<8x128xf32>
      %20 = arith.mulf %15, %19 : vector<8x128xf32>
      %cst_11 = arith.constant dense<0.000000e+00> : vector<128xf32>
      %21 = vector.multi_reduction <add>, %20, %cst_11 [0] : vector<8x128xf32> to vector<128xf32>
      %22 = vector.shape_cast %21 : vector<128xf32> to vector<1x128xf32>
      %23 = tpu.iota {dimensions = array<i32: 0>} : vector<8x128xi32>
      %c0_i32_12 = arith.constant 0 : i32
      %24 = vector.broadcast %c0_i32_12 : i32 to vector<8x128xi32>
      %25 = arith.cmpi eq, %23, %24 : vector<8x128xi32>
      %26 = vector.shape_cast %22 : vector<1x128xf32> to vector<1x128xf32>
      %27 = vector.broadcast %26 : vector<1x128xf32> to vector<8x128xf32>
      %cst_13 = arith.constant 0.000000e+00 : f32
      %28 = vector.broadcast %cst_13 : f32 to vector<8x128xf32>
      %29 = arith.select %25, %27, %28 : vector<8x128xi1>, vector<8x128xf32>
      %30 = arith.addf %11, %29 : vector<8x128xf32>
      %c0_14 = arith.constant 0 : index
      %c0_15 = arith.constant 0 : index
      %31 = vector.load %arg5[%c0_14, %c0_15] : memref<8x128xf32, #tpu.memory_space<vmem>>, vector<8x128xf32>
      tpu.vector_store %arg5[%c0_14, %c0_15], %30 {strides = array<i32>} : memref<8x128xf32, #tpu.memory_space<vmem>>, vector<8x128xf32>,
    } else {
    }
    %c0_i32_3 = arith.constant 0 : i32
    %8 = arith.cmpi eq, %arg1, %c0_i32_3 : i32
    %9 = arith.extui %8 : i1 to i32
    %c0_i32_4 = arith.constant 0 : i32
    %10 = arith.cmpi ne, %9, %c0_i32_4 : i32
    scf.if %10 {
      %c0 = arith.constant 0 : index
      %c0_5 = arith.constant 0 : index
      %11 = vector.load %arg5[%c0, %c0_5] : memref<8x128xf32, #tpu.memory_space<vmem>>, vector<8x128xf32>
      %cst = arith.constant dense<0.000000e+00> : vector<128xf32>
      %12 = vector.multi_reduction <add>, %11, %cst [0] : vector<8x128xf32> to vector<128xf32>
      %13 = vector.shape_cast %12 : vector<128xf32> to vector<1x128xf32>
      %cst_6 = arith.constant dense<0.000000e+00> : vector<1xf32>
      %14 = vector.multi_reduction <add>, %13, %cst_6 [1] : vector<1x128xf32> to vector<1xf32>
      %15 = vector.shape_cast %14 : vector<1xf32> to vector<1x1xf32>
      %cst_7 = arith.constant 3.784000e-04 : f32
      %16 = vector.broadcast %cst_7 : f32 to vector<1x1xf32>
      %17 = arith.mulf %15, %16 : vector<1x1xf32>
      %18 = vector.shape_cast %17 : vector<1x1xf32> to vector<1x1xf32>
      %19 = vector.broadcast %18 : vector<1x1xf32> to vector<8x128xf32>
      %c0_8 = arith.constant 0 : index
      %c0_9 = arith.constant 0 : index
      %20 = vector.load %arg4[%c0_8, %c0_9] : memref<8x128xf32, #tpu.memory_space<vmem>>, vector<8x128xf32>
      tpu.vector_store %arg4[%c0_8, %c0_9], %19 {strides = array<i32>} : memref<8x128xf32, #tpu.memory_space<vmem>>, vector<8x128xf32>,
    } else {
    }
    return
  }
  func.func @transform_0(%arg0: i32, %arg1: i32) -> (i32, i32) {
    %c1_i32 = arith.constant 1 : i32
    %0 = arith.muli %arg0, %c1_i32 : i32
    %1 = arith.addi %0, %arg1 : i32
    %c0_i32 = arith.constant 0 : i32
    %2 = arith.minsi %1, %c0_i32 : i32
    %c0_i32_0 = arith.constant 0 : i32
    %c0_i32_1 = arith.constant 0 : i32
    return %2, %c0_i32_0 : i32, i32
  }
  func.func @transform_1(%arg0: i32, %arg1: i32) -> (i32, i32) {
    %c1_i32 = arith.constant 1 : i32
    %0 = arith.muli %arg0, %c1_i32 : i32
    %1 = arith.addi %0, %arg1 : i32
    %c0_i32 = arith.constant 0 : i32
    %2 = arith.minsi %1, %c0_i32 : i32
    %c0_i32_0 = arith.constant 0 : i32
    %c0_i32_1 = arith.constant 0 : i32
    return %2, %c0_i32_0 : i32, i32
  }
  func.func @transform_2(%arg0: i32, %arg1: i32) -> (i32, i32) {
    %c0_i32 = arith.constant 0 : i32
    %c0_i32_0 = arith.constant 0 : i32
    return %arg0, %c0_i32 : i32, i32
  }
}

</mosaic_0001>

<llo_original>
// kernel: tpu_custom_call.1
$region0: #{tpu_custom_call.1}
  #allocation0 [shape = 'u32[]', space=smem, size = 0x4, offset = 0x4, fixed_abs, tag = 'smem constant byte address 0x4 - core index']
  #allocation1 [shape = 'u32[144,128]{1,0:T(1,128)}', space=vmem, size = 0x12000, scoped, tag = 'internal scratch']
  #allocation2 [shape = 'f32[8,128]{1,0:T(8,128)}', space=vmem, size = 0x1000, scoped, tag = 'scratch operand']
  %s0 = inlined_call_operand.hbm [shape: s8[8,128], index: 0, kind: input, shape index: {}]
  %s1 = inlined_call_operand.hbm [shape: s8[8,128], index: 1, kind: input, shape index: {}]
  %s2 = inlined_call_operand.hbm [shape: f32[8,128], index: 2, kind: output, shape index: {}]
  %s3 = sld [smem:[#allocation0]]
  $region38: #{tpu_custom_call.1} parent=0
    _
  %s5 = ssub.s32 1, %s3
  %s6 = scalar_select 0, %s5, %s3
  $region1: #{tpu_custom_call.1} parent=0
    #allocation3 [shape = 'u8[1024]{0}', space=vmem, size = 0x400, scoped, tag = 'input window, operand 0, single buffered']
    #allocation4 [shape = 's32[1]{0}', space=sflag, size = 0x4, scoped, tag = 'scoped memory for tpu_custom_call.1']
    #allocation5 [shape = 's32[1]{0}', space=sflag, size = 0x4, scoped, tag = 'scoped memory for tpu_custom_call.1']
    #allocation6 [shape = 'u8[1024]{0}', space=vmem, size = 0x400, scoped, tag = 'input window, operand 1, single buffered']
    #allocation7 [shape = 's32[1]{0}', space=sflag, size = 0x4, scoped, tag = 'scoped memory for tpu_custom_call.1']
    #allocation8 [shape = 'u8[4096]{0}', space=vmem, size = 0x1000, scoped, tag = 'output window, operand 0, single buffered']
    %7 = vsyncpa [#allocation4], 0
    %8 = vsyncpa [#allocation7], 0
    %9 = vsyncpa [#allocation5], 0
    // Predicated region
    $region2: #{tpu_custom_call.1} parent=1 // pred_check
      _
    $region3: #{tpu_custom_call.1} parent=1 // pred_check_branch
      %11 = sbr.rel (0) target = $region5
    $region4: #{tpu_custom_call.1} parent=1 // pred_region
      %s12 = sadd.s32 0, 0
      %p13 = scmp.lt.s32.totalorder %s12, 0
      %s14 = scalar_select %p13, %s12, 0
      %s16 = ssub.s32 32, 32
      %17 = vsyncadd [#allocation4], %s16
      %s18 = smul.addr %s14, 32
      %s19 = scalar_lea.hbm %s0, %s18
      %s21 = sshll.u32 [#allocation3], 4
      %s22 = int_to_ptr.vmem [resolvable:$true] %s21
      %24 = dma.hbm_to_vmem [thread:$0]  %s19, 32, %s22, [#allocation4]
    $region5: #{tpu_custom_call.1} parent=1 // pred_fallthru
      _
    // Predicated region
    $region6: #{tpu_custom_call.1} parent=1 // pred_check
      _
    $region7: #{tpu_custom_call.1} parent=1 // pred_check_branch
      %26 = sbr.rel (0) target = $region9
    $region8: #{tpu_custom_call.1} parent=1 // pred_region
      %s27 = sadd.s32 0, 0
      %p28 = scmp.lt.s32.totalorder %s27, 0
      %s29 = scalar_select %p28, %s27, 0
      %s31 = ssub.s32 32, 32
      %32 = vsyncadd [#allocation7], %s31
      %s33 = smul.addr %s29, 32
      %s34 = scalar_lea.hbm %s1, %s33
      %s36 = sshll.u32 [#allocation6], 4
      %s37 = int_to_ptr.vmem [resolvable:$true] %s36
      %39 = dma.hbm_to_vmem [thread:$0]  %s34, 32, %s37, [#allocation7]
    $region9: #{tpu_custom_call.1} parent=1 // pred_fallthru
      _
    // Predicated region
    $region10: #{tpu_custom_call.1} parent=1 // pred_check
      _
    $region11: #{tpu_custom_call.1} parent=1 // pred_check_branch
      %41 = sbr.rel (0) target = $region13
    $region12: #{tpu_custom_call.1} parent=1 // pred_region
      %42 = dma.done [#allocation4], 32
    $region13: #{tpu_custom_call.1} parent=1 // pred_fallthru
      _
    // Predicated region
    $region14: #{tpu_custom_call.1} parent=1 // pred_check
      _
    $region15: #{tpu_custom_call.1} parent=1 // pred_check_branch
      %44 = sbr.rel (0) target = $region17
    $region16: #{tpu_custom_call.1} parent=1 // pred_region
      %45 = dma.done [#allocation7], 32
    $region17: #{tpu_custom_call.1} parent=1 // pred_fallthru
      _
    %s46 = sadd.s32 0, 0
    %p47 = scmp.lt.s32.totalorder %s46, 0
    %s48 = scalar_select %p47, %s46, 0
    %s49 = sadd.s32 0, 0
    %p50 = scmp.lt.s32.totalorder %s49, 0
    %s51 = scalar_select %p50, %s49, 0
    %s52 = sadd.s32 0, 0
    %p53 = scmp.eq.s32.totalorder 0, 0
    // Predicated region
    $region18: #{tpu_custom_call.1} parent=1 // pred_check
      %p54 = pneg %p53
    $region19: #{tpu_custom_call.1} parent=1 // pred_check_branch
      %56 = sbr.rel (%p54) target = $region21
    $region20: #{tpu_custom_call.1} parent=1 // pred_region
      %57 = vst [vmem:[#allocation2] sm:$0xff] 0.0
    $region21: #{tpu_custom_call.1} parent=1 // pred_fallthru
      _
    %p58 = scmp.lt.s32.totalorder %s52, 1
    // Predicated region
    $region22: #{tpu_custom_call.1} parent=1 // pred_check
      %p59 = pneg %p58
    $region23: #{tpu_custom_call.1} parent=1 // pred_check_branch
      %61 = sbr.rel (%p59) target = $region25
    $region24: #{tpu_custom_call.1} parent=1 // pred_region
      %v62 = vld [vmem:[#allocation2] sm:$0xff]
      %v63 = vld [vmem:[#allocation3] sm:$0x3]
      %v64 = vunpack.c.0.s8 %v63
      %v65 = vcvt.s32.f32 %v64
      %v66 = vsub.f32 %v65, -25.0
      %v67 = vld [vmem:[#allocation6] sm:$0x3]
      %v68 = vunpack.c.0.s8 %v67
      %v69 = vcvt.s32.f32 %v68
      %v70 = vsub.f32 %v69, 18.0
      %v71 = vmul.f32 %v66, %v70
      %v72 = vrot.slane %v71, 4
      %v73 = vadd.f32 %v71, %v72
      %v74 = vrot.slane %v73, 2
      %v75 = vadd.f32 %v73, %v74
      %v76 = vrot.slane %v75, 1
      %v77 = vadd.f32 %v75, %v76
      %v78 = vlaneseq
      %v79 = vshrl.u32 %v78, 7
      %vm80 = vcmp.eq.s32.totalorder %v79, 0
      %v81 = vsel %vm80, %v77, 0.0
      %v82 = vadd.f32 %v62, %v81
      %83 = vst [vmem:[#allocation2] sm:$0xff] %v82
    $region25: #{tpu_custom_call.1} parent=1 // pred_fallthru
      _
    // Predicated region
    $region26: #{tpu_custom_call.1} parent=1 // pred_check
      %p84 = pneg %p53
    $region27: #{tpu_custom_call.1} parent=1 // pred_check_branch
      %86 = sbr.rel (%p84) target = $region29
    $region28: #{tpu_custom_call.1} parent=1 // pred_region
      %v87 = vld [vmem:[#allocation2] sm:$0xff]
      %v88 = vrot.slane %v87, 4
      %v89 = vadd.f32 %v87, %v88
      %v90 = vrot.slane %v89, 2
      %v91 = vadd.f32 %v89, %v90
      %v92 = vrot.slane %v91, 1
      %v93 = vadd.f32 %v91, %v92
      %94 = vadd.xlane.f32.xlu0 %v93
      %v95 = vpop.xlane.xlu0 %94
      %v96 = vmul.f32 %v95, 0.0003784
      %97 = vst [vmem:[#allocation8] sm:$0xff] %v96
    $region29: #{tpu_custom_call.1} parent=1 // pred_fallthru
      _
    // Predicated region
    $region30: #{tpu_custom_call.1} parent=1 // pred_check
      _
    $region31: #{tpu_custom_call.1} parent=1 // pred_check_branch
      %99 = sbr.rel (0) target = $region33
    $region32: #{tpu_custom_call.1} parent=1 // pred_region
      %s101 = ssub.s32 128, 128
      %102 = vsyncadd [#allocation5], %s101
      %s104 = sshll.u32 [#allocation8], 4
      %s105 = int_to_ptr.vmem [resolvable:$true] %s104
      %107 = dma.vmem_to_hbm [thread:$0]  %s105, 128, %s2, [#allocation5]
    $region33: #{tpu_custom_call.1} parent=1 // pred_fallthru
      _
    // Predicated region
    $region34: #{tpu_custom_call.1} parent=1 // pred_check
      _
    $region35: #{tpu_custom_call.1} parent=1 // pred_check_branch
      %109 = sbr.rel (0) target = $region37
    $region36: #{tpu_custom_call.1} parent=1 // pred_region
      %110 = dma.done [#allocation5], 128
    $region37: #{tpu_custom_call.1} parent=1 // pred_fallthru
      _
    %111 = vsyncpa [#allocation4], 1
    %112 = vsyncpa [#allocation7], 1
    %113 = vsyncpa [#allocation5], 1

</llo_original>
